<compile_context>
chip_gen: v7x
topology: tpu7x:2x2x1
jax: 0.10.0
libtpu: 0.0.40
codegen_flags: <defaults>
</compile_context>

<pallas_src>
import functools

import jax
import jax.numpy as jnp
from jax.experimental import pallas as pl
from jax.experimental.pallas import tpu as pltpu


def _round_up(x, m):
    return (x + m - 1) // m * m


def _swiglu_kernel(beta_ref, x_ref, w_ref, b_ref, o_ref):
    # beta_ref: SMEM (1,) scalar.
    # x_ref: (tile_m, D).  w_ref: (D, 2*tile_n) = [W1 cols | W2 cols] for this N block.
    # b_ref: (1, 2*tile_n).  o_ref: (tile_m, tile_n).
    tn = o_ref.shape[-1]
    h = jnp.dot(x_ref[...], w_ref[...], preferred_element_type=jnp.float32) + b_ref[...]
    h1 = h[:, :tn]                       # linear1 output slice
    h2 = h[:, tn:]                       # linear2 output slice
    gate = jax.nn.sigmoid(beta_ref[0] * h2)
    o_ref[...] = (h1 * gate).astype(o_ref.dtype)


@functools.partial(jax.jit, static_argnames=("tile_m", "tile_n"))
def _swiglu_pallas_2d(x2d, w_cat, b_cat, beta, tile_m, tile_n):
    M, D = x2d.shape
    grid = (D // tile_n, M // tile_m)   # N outer (weights stay resident), M inner (x streams)

    flops = 2 * M * D * (2 * D) + 4 * M * D
    bytes_accessed = 4 * (x2d.size + w_cat.size + b_cat.size + M * D)

    return pl.pallas_call(
        _swiglu_kernel,
        out_shape=jax.ShapeDtypeStruct((M, D), x2d.dtype),
        grid_spec=pltpu.PrefetchScalarGridSpec(
            num_scalar_prefetch=0,
            grid=grid,
            in_specs=[
                pl.BlockSpec(memory_space=pltpu.MemorySpace.SMEM),            # beta (1,)
                pl.BlockSpec((tile_m, D), lambda j, i: (i, 0)),               # x tile
                pl.BlockSpec((D, 2 * tile_n), lambda j, i: (0, j)),           # fused W block
                pl.BlockSpec((1, 2 * tile_n), lambda j, i: (0, j)),           # fused bias block
            ],
            out_specs=pl.BlockSpec((tile_m, tile_n), lambda j, i: (i, j)),
        ),
        compiler_params=pltpu.CompilerParams(
            dimension_semantics=("parallel", "parallel"),
            vmem_limit_bytes=64 * 1024 * 1024,
        ),
        cost_estimate=pl.CostEstimate(
            flops=flops, transcendentals=M * D, bytes_accessed=bytes_accessed),
    )(beta, x2d, w_cat, b_cat)


def swiglu_pallas(x, w1, b1, w2, b2, beta, *, tile_m=256, tile_n=512):
    """SwiGLU forward matching the torch module.

    x: (..., D) f32.  w1, w2: (D, D) in torch Linear layout (out_features, in_features).
    b1, b2: (D,).  beta: (1,) f32.
    """
    *lead, D = x.shape
    assert D % 128 == 0, "in_features must be a multiple of 128 for lane-dense tiling"
    x2d = x.reshape(-1, D)
    M = x2d.shape[0]

    # N tile: largest divisor of D that is <= tile_n (D is a multiple of 128).
    tn = min(tile_n, D)
    while D % tn != 0:
        tn //= 2

    # M tile: cap at the (8-rounded) problem size, pad ragged M with zeros.
    tm = min(tile_m, _round_up(M, 8))
    Mp = _round_up(M, tm)
    if Mp != M:
        x2d = jnp.pad(x2d, ((0, Mp - M), (0, 0)))

    # torch Linear computes x @ W.T; pre-transpose, then interleave per N block so that
    # weight block j holds [W1.T[:, j*tn:(j+1)*tn] | W2.T[:, j*tn:(j+1)*tn]].
    nb = D // tn
    w1t = w1.T.reshape(D, nb, tn)
    w2t = w2.T.reshape(D, nb, tn)
    w_cat = jnp.concatenate([w1t, w2t], axis=2).reshape(D, 2 * D)
    b_cat = jnp.concatenate(
        [b1.reshape(nb, tn), b2.reshape(nb, tn)], axis=1).reshape(1, 2 * D)

    out = _swiglu_pallas_2d(x2d, w_cat, b_cat, beta, tm, tn)
    return out[:M].reshape(*lead, D)


if __name__ == "__main__":
    key = jax.random.PRNGKey(0)

    def init_linear(k, D):
        kw, kb = jax.random.split(k)
        bound = 1.0 / jnp.sqrt(D)
        w = jax.random.uniform(kw, (D, D), jnp.float32, -bound, bound)
        b = jax.random.uniform(kb, (D,), jnp.float32, -bound, bound)
        return w, b

    def reference(x2d, w1, b1, w2, b2, beta):
        h1 = x2d @ w1.T + b1
        h2 = x2d @ w2.T + b2
        return h1 * jax.nn.sigmoid(beta[0] * h2)

    # Case 1: small shapes consistent with the module (batch=2, seq=8, in_features=128).
    k0, k1, k2, k3 = jax.random.split(key, 4)
    batch, seq, D = 2, 8, 128
    x = jax.random.normal(k0, (batch, seq, D), dtype=jnp.float32)
    w1, b1 = init_linear(k1, D)
    w2, b2 = init_linear(k2, D)
    beta = jnp.ones((1,), dtype=jnp.float32)   # torch.ones(1)

    out = jax.block_until_ready(swiglu_pallas(x, w1, b1, w2, b2, beta))
    ref = reference(x.reshape(-1, D), w1, b1, w2, b2, beta).reshape(x.shape)
    assert out.shape == x.shape
    assert jnp.allclose(out, ref, atol=1e-5, rtol=1e-5), "case 1 mismatch vs reference"

    # Case 2: multi-tile M (ragged, exercises padding) and multi-N-block weight path.
    batch2, seq2, D2 = 4, 100, 256     # M = 400 -> padded to 512, grid = (2, 2)
    kx2, kw1, kw2 = jax.random.split(k3, 3)
    x2 = jax.random.normal(kx2, (batch2, seq2, D2), dtype=jnp.float32)
    w1b, b1b = init_linear(kw1, D2)
    w2b, b2b = init_linear(kw2, D2)
    beta2 = jnp.full((1,), 0.75, dtype=jnp.float32)

    out2 = jax.block_until_ready(
        swiglu_pallas(x2, w1b, b1b, w2b, b2b, beta2, tile_m=256, tile_n=128))
    ref2 = reference(x2.reshape(-1, D2), w1b, b1b, w2b, b2b, beta2).reshape(x2.shape)
    assert out2.shape == x2.shape
    assert jnp.allclose(out2, ref2, atol=2e-4, rtol=2e-4), "case 2 mismatch vs reference"

    print("KERNEL_OK")
</pallas_src>

<mosaic_0001>
module attributes {stable_mosaic.version = 11 : i64} {
  func.func @_swiglu_kernel(%arg0: i32, %arg1: i32, %arg2: memref<1xf32, #tpu.memory_space<smem>>, %arg3: memref<16x128xf32, #tpu.memory_space<vmem>>, %arg4: memref<128x256xf32, #tpu.memory_space<vmem>>, %arg5: memref<1x256xf32, #tpu.memory_space<vmem>>, %arg6: memref<16x128xf32, #tpu.memory_space<vmem>>) attributes {dimension_semantics = [#tpu.dimension_semantics<parallel>, #tpu.dimension_semantics<parallel>], iteration_bounds = array<i64: 1, 1>, scalar_prefetch = 0 : i64, scratch_operands = 0 : i64, tpu.core_type = #tpu.core_type<tc>, window_params = [{transform_indices = @transform_0, window_bounds = array<i64: 1>}, {transform_indices = @transform_1, window_bounds = array<i64: 16, 128>}, {transform_indices = @transform_2, window_bounds = array<i64: 128, 256>}, {transform_indices = @transform_3, window_bounds = array<i64: 1, 256>}, {transform_indices = @transform_4, window_bounds = array<i64: 16, 128>}]} {
    %c0 = arith.constant 0 : index
    %c0_0 = arith.constant 0 : index
    %0 = vector.load %arg3[%c0, %c0_0] : memref<16x128xf32, #tpu.memory_space<vmem>>, vector<16x128xf32>
    %c0_1 = arith.constant 0 : index
    %c0_2 = arith.constant 0 : index
    %1 = vector.load %arg4[%c0_1, %c0_2] : memref<128x256xf32, #tpu.memory_space<vmem>>, vector<128x256xf32>
    %cst = arith.constant dense<0.000000e+00> : vector<16x256xf32>
    %2 = tpu.matmul %0, %1, %cst {dimension_numbers = #tpu.dot_dimension_numbers<[1], [0], [0], [1], [0, 0, 1, 1], [], []>} : vector<16x128xf32>, vector<128x256xf32>, vector<16x256xf32> -> vector<16x256xf32>
    %c0_3 = arith.constant 0 : index
    %c0_4 = arith.constant 0 : index
    %3 = vector.load %arg5[%c0_3, %c0_4] : memref<1x256xf32, #tpu.memory_space<vmem>>, vector<1x256xf32>
    %4 = vector.broadcast %3 : vector<1x256xf32> to vector<16x256xf32>
    %5 = arith.addf %2, %4 : vector<16x256xf32>
    %6 = vector.extract_strided_slice %5 {offsets = [0, 0], sizes = [16, 128], strides = [1, 1]} : vector<16x256xf32> to vector<16x128xf32>
    %7 = vector.extract_strided_slice %5 {offsets = [0, 128], sizes = [16, 128], strides = [1, 1]} : vector<16x256xf32> to vector<16x128xf32>
    %c0_5 = arith.constant 0 : index
    %8 = memref.load %arg2[%c0_5] : memref<1xf32, #tpu.memory_space<smem>>
    %9 = vector.broadcast %8 : f32 to vector<16x128xf32>
    %10 = arith.mulf %9, %7 : vector<16x128xf32>
    %11 = arith.negf %10 : vector<16x128xf32>
    %12 = math.exp %11 : vector<16x128xf32>
    %cst_6 = arith.constant 1.000000e+00 : f32
    %13 = vector.broadcast %cst_6 : f32 to vector<16x128xf32>
    %14 = arith.addf %13, %12 : vector<16x128xf32>
    %15 = arith.divf %13, %14 : vector<16x128xf32>
    %16 = arith.mulf %6, %15 : vector<16x128xf32>
    %c0_7 = arith.constant 0 : index
    %c0_8 = arith.constant 0 : index
    %17 = vector.load %arg6[%c0_7, %c0_8] : memref<16x128xf32, #tpu.memory_space<vmem>>, vector<16x128xf32>
    tpu.vector_store %arg6[%c0_7, %c0_8], %16 {strides = array<i32>} : memref<16x128xf32, #tpu.memory_space<vmem>>, vector<16x128xf32>,
    return
  }
  func.func @transform_0(%arg0: i32, %arg1: i32) -> i32 {
    %c0_i32 = arith.constant 0 : i32
    %c0_i32_0 = arith.constant 0 : i32
    return %c0_i32 : i32
  }
  func.func @transform_1(%arg0: i32, %arg1: i32) -> (i32, i32) {
    %c0_i32 = arith.constant 0 : i32
    %c0_i32_0 = arith.constant 0 : i32
    return %arg1, %c0_i32 : i32, i32
  }
  func.func @transform_2(%arg0: i32, %arg1: i32) -> (i32, i32) {
    %c0_i32 = arith.constant 0 : i32
    %c0_i32_0 = arith.constant 0 : i32
    return %c0_i32, %arg0 : i32, i32
  }
  func.func @transform_3(%arg0: i32, %arg1: i32) -> (i32, i32) {
    %c0_i32 = arith.constant 0 : i32
    %c0_i32_0 = arith.constant 0 : i32
    return %c0_i32, %arg0 : i32, i32
  }
  func.func @transform_4(%arg0: i32, %arg1: i32) -> (i32, i32) {
    %c0_i32 = arith.constant 0 : i32
    return %arg1, %arg0 : i32, i32
  }
}

</mosaic_0001>

<llo_original>
// kernel: _swiglu_pallas_2d.1
$region0: #{_swiglu_pallas_2d.1}
  #allocation0 [shape = 'u32[]', space=smem, size = 0x4, offset = 0x4, fixed_abs, tag = 'smem constant byte address 0x4 - core index']
  #allocation1 [shape = 'u32[144,128]{1,0:T(1,128)}', space=vmem, size = 0x12000, scoped, tag = 'internal scratch']
  #allocation2 [shape = 'f32[1]{0:T(128)S(6)}', space=smem, size = 0x200, scoped, tag = 'scoped memory for _swiglu_pallas_2d.1']
  %s0 = inlined_call_operand.<no memory space> [shape: f32[1], index: 0, kind: input, shape index: {}]
  %s1 = inlined_call_operand.hbm [shape: f32[16,128], index: 1, kind: input, shape index: {}]
  %s2 = inlined_call_operand.hbm [shape: f32[128,256], index: 2, kind: input, shape index: {}]
  %s3 = inlined_call_operand.hbm [shape: f32[1,256], index: 3, kind: input, shape index: {}]
  %s4 = inlined_call_operand.hbm [shape: f32[16,128], index: 4, kind: output, shape index: {}]
  %s5 = sld [smem:[#allocation0]]
  $region38: #{_swiglu_pallas_2d.1} parent=0
    _
  %s7 = ssub.s32 1, %s5
  %s8 = scalar_select 0, %s7, %s5
  %9 = sst [smem:[#allocation2]] %s0
  $region1: #{_swiglu_pallas_2d.1} parent=0
    #allocation3 [shape = 'u8[8192]{0}', space=vmem, size = 0x2000, scoped, tag = 'input window, operand 1, single buffered']
    #allocation4 [shape = 's32[1]{0}', space=sflag, size = 0x4, scoped, tag = 'scoped memory for _swiglu_pallas_2d.1']
    #allocation5 [shape = 's32[1]{0}', space=sflag, size = 0x4, scoped, tag = 'scoped memory for _swiglu_pallas_2d.1']
    #allocation6 [shape = 'u8[131072]{0}', space=vmem, size = 0x20000, scoped, tag = 'input window, operand 2, single buffered']
    #allocation7 [shape = 's32[1]{0}', space=sflag, size = 0x4, scoped, tag = 'scoped memory for _swiglu_pallas_2d.1']
    #allocation8 [shape = 'u8[1024]{0}', space=vmem, size = 0x400, scoped, tag = 'input window, operand 3, single buffered']
    #allocation9 [shape = 'u8[8192]{0}', space=vmem, size = 0x2000, scoped, tag = 'output window, operand 0, single buffered']
    %10 = vsyncpa [#allocation4], 0
    %11 = vsyncpa [#allocation7], 0
    %12 = vsyncpa [#allocation5], 0
    // Predicated region
    $region2: #{_swiglu_pallas_2d.1} parent=1 // pred_check
      _
    $region3: #{_swiglu_pallas_2d.1} parent=1 // pred_check_branch
      %14 = sbr.rel (0) target = $region5
    $region4: #{_swiglu_pallas_2d.1} parent=1 // pred_region
      _
    $region5: #{_swiglu_pallas_2d.1} parent=1 // pred_fallthru
      _
    // Predicated region
    $region6: #{_swiglu_pallas_2d.1} parent=1 // pred_check
      _
    $region7: #{_swiglu_pallas_2d.1} parent=1 // pred_check_branch
      %16 = sbr.rel (0) target = $region9
    $region8: #{_swiglu_pallas_2d.1} parent=1 // pred_region
      %s18 = ssub.s32 256, 256
      %19 = vsyncadd [#allocation4], %s18
      %s20 = sshll.u32 [#allocation3], 4
      %s21 = int_to_ptr.vmem [resolvable:$true] %s20
      %26 = dma.hbm_to_vmem [thread:$0]  %s1, 256, %s21, [#allocation4], 128, 128, 8
    $region9: #{_swiglu_pallas_2d.1} parent=1 // pred_fallthru
      _
    // Predicated region
    $region10: #{_swiglu_pallas_2d.1} parent=1 // pred_check
      _
    $region11: #{_swiglu_pallas_2d.1} parent=1 // pred_check_branch
      %28 = sbr.rel (0) target = $region13
    $region12: #{_swiglu_pallas_2d.1} parent=1 // pred_region
      %s30 = ssub.s32 4096, 4096
      %31 = vsyncadd [#allocation7], %s30
      %s32 = sshll.u32 [#allocation6], 4
      %s33 = int_to_ptr.vmem [resolvable:$true] %s32
      %38 = dma.hbm_to_vmem [thread:$0]  %s2, 4096, %s33, [#allocation7], 256, 256, 16
    $region13: #{_swiglu_pallas_2d.1} parent=1 // pred_fallthru
      _
    // Predicated region
    $region14: #{_swiglu_pallas_2d.1} parent=1 // pred_check
      _
    $region15: #{_swiglu_pallas_2d.1} parent=1 // pred_check_branch
      %40 = sbr.rel (0) target = $region17
    $region16: #{_swiglu_pallas_2d.1} parent=1 // pred_region
      %s42 = ssub.s32 32, 32
      %43 = vsyncadd [#allocation7], %s42
      %s45 = sshll.u32 [#allocation8], 4
      %s46 = int_to_ptr.vmem [resolvable:$true] %s45
      %48 = dma.hbm_to_vmem [thread:$0]  %s3, 32, %s46, [#allocation7]
    $region17: #{_swiglu_pallas_2d.1} parent=1 // pred_fallthru
      _
    // Predicated region
    $region18: #{_swiglu_pallas_2d.1} parent=1 // pred_check
      _
    $region19: #{_swiglu_pallas_2d.1} parent=1 // pred_check_branch
      %50 = sbr.rel (0) target = $region21
    $region20: #{_swiglu_pallas_2d.1} parent=1 // pred_region
      %51 = dma.done [#allocation4], 256
    $region21: #{_swiglu_pallas_2d.1} parent=1 // pred_fallthru
      _
    // Predicated region
    $region22: #{_swiglu_pallas_2d.1} parent=1 // pred_check
      _
    $region23: #{_swiglu_pallas_2d.1} parent=1 // pred_check_branch
      %53 = sbr.rel (0) target = $region25
    $region24: #{_swiglu_pallas_2d.1} parent=1 // pred_region
      %54 = dma.done [#allocation7], 4096
    $region25: #{_swiglu_pallas_2d.1} parent=1 // pred_fallthru
      _
    // Predicated region
    $region26: #{_swiglu_pallas_2d.1} parent=1 // pred_check
      _
    $region27: #{_swiglu_pallas_2d.1} parent=1 // pred_check_branch
      %56 = sbr.rel (0) target = $region29
    $region28: #{_swiglu_pallas_2d.1} parent=1 // pred_region
      %57 = dma.done [#allocation7], 32
    $region29: #{_swiglu_pallas_2d.1} parent=1 // pred_fallthru
      _
    %v58 = vld [vmem:[#allocation3] sm:$0xff]
    %v59 = vld [vmem:[#allocation3 + $0x8] sm:$0xff]
    %v60 = vld [vmem:[#allocation6] sm:$0xff]
    %v61 = vld [vmem:[#allocation6 + $0x8] sm:$0xff]
    %v62 = vld [vmem:[#allocation6 + $0x10] sm:$0xff]
    %v63 = vld [vmem:[#allocation6 + $0x18] sm:$0xff]
    %v64 = vld [vmem:[#allocation6 + $0x20] sm:$0xff]
    %v65 = vld [vmem:[#allocation6 + $0x28] sm:$0xff]
    %v66 = vld [vmem:[#allocation6 + $0x30] sm:$0xff]
    %v67 = vld [vmem:[#allocation6 + $0x38] sm:$0xff]
    %v68 = vld [vmem:[#allocation6 + $0x40] sm:$0xff]
    %v69 = vld [vmem:[#allocation6 + $0x48] sm:$0xff]
    %v70 = vld [vmem:[#allocation6 + $0x50] sm:$0xff]
    %v71 = vld [vmem:[#allocation6 + $0x58] sm:$0xff]
    %v72 = vld [vmem:[#allocation6 + $0x60] sm:$0xff]
    %v73 = vld [vmem:[#allocation6 + $0x68] sm:$0xff]
    %v74 = vld [vmem:[#allocation6 + $0x70] sm:$0xff]
    %v75 = vld [vmem:[#allocation6 + $0x78] sm:$0xff]
    %v76 = vld [vmem:[#allocation6 + $0x80] sm:$0xff]
    %v77 = vld [vmem:[#allocation6 + $0x88] sm:$0xff]
    %v78 = vld [vmem:[#allocation6 + $0x90] sm:$0xff]
    %v79 = vld [vmem:[#allocation6 + $0x98] sm:$0xff]
    %v80 = vld [vmem:[#allocation6 + $0xa0] sm:$0xff]
    %v81 = vld [vmem:[#allocation6 + $0xa8] sm:$0xff]
    %v82 = vld [vmem:[#allocation6 + $0xb0] sm:$0xff]
    %v83 = vld [vmem:[#allocation6 + $0xb8] sm:$0xff]
    %v84 = vld [vmem:[#allocation6 + $0xc0] sm:$0xff]
    %v85 = vld [vmem:[#allocation6 + $0xc8] sm:$0xff]
    %v86 = vld [vmem:[#allocation6 + $0xd0] sm:$0xff]
    %v87 = vld [vmem:[#allocation6 + $0xd8] sm:$0xff]
    %v88 = vld [vmem:[#allocation6 + $0xe0] sm:$0xff]
    %v89 = vld [vmem:[#allocation6 + $0xe8] sm:$0xff]
    %v90 = vld [vmem:[#allocation6 + $0xf0] sm:$0xff]
    %v91 = vld [vmem:[#allocation6 + $0xf8] sm:$0xff]
    %v92 = vld [vmem:[#allocation8] sm:$0x3]
    %v94 = vlaneseq
    %v95 = vshrl.u32 %v94, 7
    %v96 = vsub.s32 0, %v95
    %v97 = vrot.slane %v92, %v96
    %v98 = vlaneseq
    %v99 = vshrl.u32 %v98, 7
    %v100 = vsub.s32 1, %v99
    %v101 = vrot.slane %v92, %v100
    %104 = vmatprep.subr.mxu0 %v61
    %105 = vmatpush1.msra.mxu0 %v60
    %106 = vmatprep.subr.mxu0 %v63
    %107 = vmatpush1.msra.mxu0 %v62
    %108 = vmatprep.subr.mxu0 %v65
    %109 = vmatpush1.msra.mxu0 %v64
    %110 = vmatprep.subr.mxu0 %v67
    %111 = vmatpush1.msra.mxu0 %v66
    %112 = vmatprep.subr.mxu0 %v69
    %113 = vmatpush1.msra.mxu0 %v68
    %114 = vmatprep.subr.mxu0 %v71
    %115 = vmatpush1.msra.mxu0 %v70
    %116 = vmatprep.subr.mxu0 %v73
    %117 = vmatpush1.msra.mxu0 %v72
    %118 = vmatprep.subr.mxu0 %v75
    %119 = vmatpush1.msra.mxu0 %v74
    %120 = vmatprep.subr.mxu0 %v77
    %121 = vmatpush1.msra.mxu0 %v76
    %122 = vmatprep.subr.mxu0 %v79
    %123 = vmatpush1.msra.mxu0 %v78
    %124 = vmatprep.subr.mxu0 %v81
    %125 = vmatpush1.msra.mxu0 %v80
    %126 = vmatprep.subr.mxu0 %v83
    %127 = vmatpush1.msra.mxu0 %v82
    %128 = vmatprep.subr.mxu0 %v85
    %129 = vmatpush1.msra.mxu0 %v84
    %130 = vmatprep.subr.mxu0 %v87
    %131 = vmatpush1.msra.mxu0 %v86
    %132 = vmatprep.subr.mxu0 %v89
    %133 = vmatpush1.msra.mxu0 %v88
    %134 = vmatprep.subr.mxu0 %v91
    %135 = vmatpush1.msra.mxu0 %v90
    %136 = vmatprep.subr.mxu0 0.0
    %137 = vmatpush1.msra.mxu0 0.0
    %138 = vmatprep.subr.mxu0 0.0
    %139 = vmatpush1.msra.mxu0 0.0
    %140 = vmatprep.subr.mxu0 0.0
    %141 = vmatpush1.msra.mxu0 0.0
    %142 = vmatprep.subr.mxu0 0.0
    %143 = vmatpush1.msra.mxu0 0.0
    %144 = vmatprep.subr.mxu0 0.0
    %145 = vmatpush1.msra.mxu0 0.0
    %146 = vmatprep.subr.mxu0 0.0
    %147 = vmatpush1.msra.mxu0 0.0
    %148 = vmatprep.subr.mxu0 0.0
    %149 = vmatpush1.msra.mxu0 0.0
    %150 = vmatprep.subr.mxu0 0.0
    %151 = vmatpush1.msra.mxu0 0.0
    %152 = vmatprep.subr.mxu0 0.0
    %153 = vmatpush1.msra.mxu0 0.0
    %154 = vmatprep.subr.mxu0 0.0
    %155 = vmatpush1.msra.mxu0 0.0
    %156 = vmatprep.subr.mxu0 0.0
    %157 = vmatpush1.msra.mxu0 0.0
    %158 = vmatprep.subr.mxu0 0.0
    %159 = vmatpush1.msra.mxu0 0.0
    %160 = vmatprep.subr.mxu0 0.0
    %161 = vmatpush1.msra.mxu0 0.0
    %162 = vmatprep.subr.mxu0 0.0
    %163 = vmatpush1.msra.mxu0 0.0
    %164 = vmatprep.subr.mxu0 0.0
    %165 = vmatpush1.msra.mxu0 0.0
    %166 = vmatprep.subr.mxu0 0.0
    %167 = vmatpush1.msra.mxu0 0.0
    %168 = vmatprep.mubr.f32.mxu0 0.0
    %169 = vmatmul.mubr.f32.gmra.mrb[0].mxu0 %v58
    %v170 = vpop.f32.mrb[0].mxu0
    %v171 = vadd.f32 %v97, %v170
    %v172 = vpop.f32.mrb[0].mxu0
    %v173 = vadd.f32 %v101, %v172
    %174 = vmatprep.mubr.f32.mxu0 0.0
    %175 = vmatmul.mubr.f32.gmra.mrb[0].mxu0 %v59
    %v176 = vpop.f32.mrb[0].mxu0
    %v177 = vadd.f32 %v97, %v176
    %v178 = vpop.f32.mrb[0].mxu0
    %v179 = vadd.f32 %v101, %v178
    %180 = vdwg.mxu0
    %s181 = sld [smem:[#allocation2]]
    %v182 = vstv %s181
    %v183 = vmul.f32 %v182, %v173
    %v184 = vmul.f32 %v182, %v179
    %v185 = vxor.u32 %v183, 2147483648
    %v186 = vxor.u32 %v184, 2147483648
    %v187 = vmul.f32 %v185, 1.442695
    %v188 = vpow.pop %v187
    %v189 = vmul.f32 %v186, 1.442695
    %v190 = vpow.pop %v189
    %v191 = vadd.f32 %v188, 1.0
    %v192 = vadd.f32 %v190, 1.0
    %v193 = vrcp.pop %v191
    %v194 = vmul.f32 1.0, %v193
    %v195 = vrcp.pop %v192
    %v196 = vmul.f32 1.0, %v195
    %v197 = vmul.f32 %v171, %v194
    %v198 = vmul.f32 %v177, %v196
    %199 = vst [vmem:[#allocation9] sm:$0xff] %v197
    %200 = vst [vmem:[#allocation9 + $0x8] sm:$0xff] %v198
    // Predicated region
    $region30: #{_swiglu_pallas_2d.1} parent=1 // pred_check
      _
    $region31: #{_swiglu_pallas_2d.1} parent=1 // pred_check_branch
      %202 = sbr.rel (0) target = $region33
    $region32: #{_swiglu_pallas_2d.1} parent=1 // pred_region
      %s204 = ssub.s32 256, 256
      %205 = vsyncadd [#allocation5], %s204
      %s206 = sshll.u32 [#allocation9], 4
      %s207 = int_to_ptr.vmem [resolvable:$true] %s206
      %212 = dma.vmem_to_hbm [thread:$0]  %s207, 256, %s4, [#allocation5], 128, 128, 8
    $region33: #{_swiglu_pallas_2d.1} parent=1 // pred_fallthru
      _
    // Predicated region
    $region34: #{_swiglu_pallas_2d.1} parent=1 // pred_check
      _
    $region35: #{_swiglu_pallas_2d.1} parent=1 // pred_check_branch
      %214 = sbr.rel (0) target = $region37
    $region36: #{_swiglu_pallas_2d.1} parent=1 // pred_region
      %215 = dma.done [#allocation5], 256
    $region37: #{_swiglu_pallas_2d.1} parent=1 // pred_fallthru
      _
    %216 = vsyncpa [#allocation4], 1
    %217 = vsyncpa [#allocation7], 1
    %218 = vsyncpa [#allocation5], 1

</llo_original>
